<compile_context>
chip_gen: v7x
topology: tpu7x:2x2x1
jax: 0.10.0
libtpu: 0.0.40
codegen_flags: <defaults>
</compile_context>

<pallas_src>
import math

import jax
import jax.numpy as jnp
from jax.experimental import pallas as pl
from jax.experimental.pallas import tpu as pltpu

IN_FEATURES = 6
HIDDEN_SIZE = 20
HIDDEN_LAYERS = 3
OUT_FEATURES = 1

_DIMS = [IN_FEATURES] + [HIDDEN_SIZE] * (HIDDEN_LAYERS + 1) + [OUT_FEATURES]
_LAYER_SHAPES = [(_DIMS[i + 1], _DIMS[i]) for i in range(len(_DIMS) - 1)]  # (out, in)
_NUM_LAYERS = len(_LAYER_SHAPES)

# Packed-parameter slab: one 24-sublane row block per layer (24 >= 20, multiple
# of 8); W at cols [0:in_f], bias in col [in_f].
_ROW_STRIDE = 24
PACK_ROWS = _NUM_LAYERS * _ROW_STRIDE   # 120
PACK_COLS = 128

_MACS_PER_ELEM = sum(o * i for o, i in _LAYER_SHAPES)        # 1340 MACs / element
_TANH_PER_ELEM = HIDDEN_SIZE * (HIDDEN_LAYERS + 1)           # 80 tanh / element


def _ceil_div(a, b):
    return -(-a // b)


def _make_mlp_kernel(matmul_dtype):
    def kernel(t_ref, m_ref, mu_ref, k_ref, y0_ref, v0_ref, p_ref, o_ref, x_s):
        # Assemble the (6, tn) layer-0 activation: six sublane writes into VMEM
        # scratch (replaces the host-side jnp.stack and its extra HBM pass).
        x_s[0:1, :] = t_ref[...]
        x_s[1:2, :] = m_ref[...]
        x_s[2:3, :] = mu_ref[...]
        x_s[3:4, :] = k_ref[...]
        x_s[4:5, :] = y0_ref[...]
        x_s[5:6, :] = v0_ref[...]
        h = x_s[0:IN_FEATURES, :]                     # (6, tn), lane-dense

        for li, (out_f, in_f) in enumerate(_LAYER_SHAPES):
            r = li * _ROW_STRIDE
            w = p_ref[r:r + out_f, 0:in_f]            # (out_f, in_f)
            b = p_ref[r:r + out_f, in_f:in_f + 1]     # (out_f, 1) -> lane broadcast
            h = jnp.dot(w.astype(matmul_dtype), h.astype(matmul_dtype),
                        preferred_element_type=jnp.float32) + b
            if li < _NUM_LAYERS - 1:
                # f32 tanh on the EUP (binding unit); bf16 tanh is a further
                # v6e/v7x-only option, intentionally not taken for portability.
                h = jnp.tanh(h)
        o_ref[...] = h.astype(o_ref.dtype)

    return kernel


def _choose_tiling(batch, tn_target):
    """Pick the lane tile (multiple of 128, <= tn_target; full batch if tiny).

    Guarantees >= 2 grid steps when batch >= 256 (keeps both v7x TensorCores
    busy) and prefers an even number of steps.  No padding is ever introduced:
    the last grid block may be ragged.
    """
    nb128 = _ceil_div(batch, 128)            # 128-lane groups needed
    if nb128 <= 1:
        return batch                         # single block == full (tiny) array
    n_blocks = max(2, _ceil_div(nb128 * 128, tn_target))
    if n_blocks > 2 and n_blocks % 2 == 1:
        n_blocks += 1
    n_blocks = min(n_blocks, nb128)
    return _ceil_div(nb128, n_blocks) * 128


def mlp_forward(xs, packed_params, *, tn_target=8192, matmul_dtype=jnp.float32):
    """xs: list of six (1, batch) f32 rows; packed_params: (120, 128) f32 slab."""
    assert tn_target % 128 == 0
    batch = xs[0].shape[1]
    tn = _choose_tiling(batch, tn_target)
    grid = (_ceil_div(batch, tn),)

    lane_spec = pl.BlockSpec((1, tn), lambda i: (0, i))
    y = pl.pallas_call(
        _make_mlp_kernel(matmul_dtype),
        out_shape=jax.ShapeDtypeStruct((OUT_FEATURES, batch), jnp.float32),
        grid_spec=pltpu.PrefetchScalarGridSpec(
            num_scalar_prefetch=0,
            grid=grid,
            in_specs=[lane_spec] * 6 + [
                # Constant block index -> fetched once, resident across the grid.
                pl.BlockSpec((PACK_ROWS, PACK_COLS), lambda i: (0, 0)),
            ],
            out_specs=pl.BlockSpec((OUT_FEATURES, tn), lambda i: (0, i)),
            scratch_shapes=[pltpu.VMEM((8, tn), jnp.float32)],
        ),
        compiler_params=pltpu.CompilerParams(
            dimension_semantics=("parallel",)),
        cost_estimate=pl.CostEstimate(
            flops=2 * _MACS_PER_ELEM * batch,
            transcendentals=_TANH_PER_ELEM * batch,
            bytes_accessed=4 * (IN_FEATURES + OUT_FEATURES) * batch),
    )(*xs, packed_params)
    return y                                   # (1, batch)


def init_params(key):
    """PyTorch nn.Linear default init: U(-1/sqrt(fan_in), 1/sqrt(fan_in)); W: (out, in)."""
    params = []
    for out_f, in_f in _LAYER_SHAPES:
        key, kw, kb = jax.random.split(key, 3)
        bound = 1.0 / math.sqrt(in_f)
        w = jax.random.uniform(kw, (out_f, in_f), jnp.float32, -bound, bound)
        b = jax.random.uniform(kb, (out_f,), jnp.float32, -bound, bound)
        params.append((w, b))
    return params


def pack_params(params):
    """Pack all (W, b) pairs into one (PACK_ROWS, PACK_COLS) f32 slab."""
    p = jnp.zeros((PACK_ROWS, PACK_COLS), jnp.float32)
    for li, (w, b) in enumerate(params):
        out_f, in_f = w.shape
        r = li * _ROW_STRIDE
        p = p.at[r:r + out_f, 0:in_f].set(w)
        p = p.at[r:r + out_f, in_f].set(b)
    return p


def pinn_vanilla_oscillator_forward(packed_params, t, m, mu, k, y0, v0,
                                    *, tn_target=8192, matmul_dtype=jnp.float32):
    orig_shape = t.shape
    batch = math.prod(orig_shape[:-1])
    # The torch module requires each field to contribute exactly one feature.
    assert math.prod(orig_shape) == batch, "expected a trailing feature dim of 1"
    # Each field stays a contiguous lane-dense (1, batch) row: no host-side
    # stack/concat and no padding -> zero extra HBM passes before the kernel.
    xs = [a.reshape(1, batch).astype(jnp.float32) for a in (t, m, mu, k, y0, v0)]
    y = mlp_forward(xs, packed_params, tn_target=tn_target,
                    matmul_dtype=matmul_dtype)          # (1, batch)
    return y.reshape(orig_shape)


def _reference_forward(params, t, m, mu, k, y0, v0):
    orig_shape = t.shape
    batch = math.prod(orig_shape[:-1])
    x = jnp.concatenate([a.reshape(batch, -1) for a in (t, m, mu, k, y0, v0)],
                        axis=1)                          # (batch, 6)
    h = x
    for i, (w, b) in enumerate(params):                  # w: (out, in)
        h = h @ w.T + b
        if i < len(params) - 1:
            h = jnp.tanh(h)
    return h.reshape(orig_shape)


if __name__ == "__main__":
    key = jax.random.PRNGKey(0)
    params = init_params(key)
    packed = pack_params(params)

    def make_inputs(shape, key):
        key, *ks = jax.random.split(key, 7)
        return [jax.random.normal(kk, shape, jnp.float32) for kk in ks], key

    # Case 1: tiny batch (16) -> single full-array block, no padding.
    # Case 2: ragged batch (2100) -> grid of 2 lane tiles, ragged last block.
    for shape in [(2, 8, 1), (3, 700, 1)]:
        fields, key = make_inputs(shape, key)
        out = pinn_vanilla_oscillator_forward(packed, *fields)
        out = jax.block_until_ready(out)
        ref = _reference_forward(params, *fields)
        assert out.shape == shape
        assert jnp.allclose(out, ref, atol=1e-5, rtol=1e-5), shape

    # Case 3: small tn_target -> even multi-step grid with a ragged last block.
    fields, key = make_inputs((3, 700, 1), key)
    out = pinn_vanilla_oscillator_forward(packed, *fields, tn_target=512)
    out = jax.block_until_ready(out)
    ref = _reference_forward(params, *fields)
    assert jnp.allclose(out, ref, atol=1e-5, rtol=1e-5)

    # Case 4: bf16 matmul fast path (v6e/v7x headroom) -- looser tolerance.
    out_bf16 = pinn_vanilla_oscillator_forward(packed, *fields,
                                               matmul_dtype=jnp.bfloat16)
    out_bf16 = jax.block_until_ready(out_bf16)
    assert jnp.allclose(out_bf16, ref, atol=1e-1, rtol=1e-1)

    print("KERNEL_OK")
</pallas_src>

<mosaic_0001>
module attributes {stable_mosaic.version = 11 : i64} {
  func.func @kernel(%arg0: i32, %arg1: memref<1x16xf32, #tpu.memory_space<vmem>>, %arg2: memref<1x16xf32, #tpu.memory_space<vmem>>, %arg3: memref<1x16xf32, #tpu.memory_space<vmem>>, %arg4: memref<1x16xf32, #tpu.memory_space<vmem>>, %arg5: memref<1x16xf32, #tpu.memory_space<vmem>>, %arg6: memref<1x16xf32, #tpu.memory_space<vmem>>, %arg7: memref<120x128xf32, #tpu.memory_space<vmem>>, %arg8: memref<1x16xf32, #tpu.memory_space<vmem>>, %arg9: memref<8x16xf32, #tpu.memory_space<vmem>>) attributes {dimension_semantics = [#tpu.dimension_semantics<parallel>], iteration_bounds = array<i64: 1>, scalar_prefetch = 0 : i64, scratch_operands = 1 : i64, tpu.core_type = #tpu.core_type<tc>, window_params = [{transform_indices = @transform_0, window_bounds = array<i64: 1, 16>}, {transform_indices = @transform_1, window_bounds = array<i64: 1, 16>}, {transform_indices = @transform_2, window_bounds = array<i64: 1, 16>}, {transform_indices = @transform_3, window_bounds = array<i64: 1, 16>}, {transform_indices = @transform_4, window_bounds = array<i64: 1, 16>}, {transform_indices = @transform_5, window_bounds = array<i64: 1, 16>}, {pipeline_mode = #tpu.pipeline_mode<synchronous>, transform_indices = @transform_6, window_bounds = array<i64: 120, 128>}, {transform_indices = @transform_7, window_bounds = array<i64: 1, 16>}]} {
    %c0 = arith.constant 0 : index
    %c0_0 = arith.constant 0 : index
    %0 = vector.load %arg1[%c0, %c0_0] : memref<1x16xf32, #tpu.memory_space<vmem>>, vector<1x16xf32>
    %c0_1 = arith.constant 0 : index
    %c0_2 = arith.constant 0 : index
    %1 = vector.load %arg9[%c0_1, %c0_2] : memref<8x16xf32, #tpu.memory_space<vmem>>, vector<1x16xf32>
    tpu.vector_store %arg9[%c0_1, %c0_2], %0 {strides = array<i32>} : memref<8x16xf32, #tpu.memory_space<vmem>>, vector<1x16xf32>,
    %c0_3 = arith.constant 0 : index
    %c0_4 = arith.constant 0 : index
    %2 = vector.load %arg2[%c0_3, %c0_4] : memref<1x16xf32, #tpu.memory_space<vmem>>, vector<1x16xf32>
    %c1 = arith.constant 1 : index
    %c0_5 = arith.constant 0 : index
    %3 = vector.load %arg9[%c1, %c0_5] : memref<8x16xf32, #tpu.memory_space<vmem>>, vector<1x16xf32>
    tpu.vector_store %arg9[%c1, %c0_5], %2 {strides = array<i32>} : memref<8x16xf32, #tpu.memory_space<vmem>>, vector<1x16xf32>,
    %c0_6 = arith.constant 0 : index
    %c0_7 = arith.constant 0 : index
    %4 = vector.load %arg3[%c0_6, %c0_7] : memref<1x16xf32, #tpu.memory_space<vmem>>, vector<1x16xf32>
    %c2 = arith.constant 2 : index
    %c0_8 = arith.constant 0 : index
    %5 = vector.load %arg9[%c2, %c0_8] : memref<8x16xf32, #tpu.memory_space<vmem>>, vector<1x16xf32>
    tpu.vector_store %arg9[%c2, %c0_8], %4 {strides = array<i32>} : memref<8x16xf32, #tpu.memory_space<vmem>>, vector<1x16xf32>,
    %c0_9 = arith.constant 0 : index
    %c0_10 = arith.constant 0 : index
    %6 = vector.load %arg4[%c0_9, %c0_10] : memref<1x16xf32, #tpu.memory_space<vmem>>, vector<1x16xf32>
    %c3 = arith.constant 3 : index
    %c0_11 = arith.constant 0 : index
    %7 = vector.load %arg9[%c3, %c0_11] : memref<8x16xf32, #tpu.memory_space<vmem>>, vector<1x16xf32>
    tpu.vector_store %arg9[%c3, %c0_11], %6 {strides = array<i32>} : memref<8x16xf32, #tpu.memory_space<vmem>>, vector<1x16xf32>,
    %c0_12 = arith.constant 0 : index
    %c0_13 = arith.constant 0 : index
    %8 = vector.load %arg5[%c0_12, %c0_13] : memref<1x16xf32, #tpu.memory_space<vmem>>, vector<1x16xf32>
    %c4 = arith.constant 4 : index
    %c0_14 = arith.constant 0 : index
    %9 = vector.load %arg9[%c4, %c0_14] : memref<8x16xf32, #tpu.memory_space<vmem>>, vector<1x16xf32>
    tpu.vector_store %arg9[%c4, %c0_14], %8 {strides = array<i32>} : memref<8x16xf32, #tpu.memory_space<vmem>>, vector<1x16xf32>,
    %c0_15 = arith.constant 0 : index
    %c0_16 = arith.constant 0 : index
    %10 = vector.load %arg6[%c0_15, %c0_16] : memref<1x16xf32, #tpu.memory_space<vmem>>, vector<1x16xf32>
    %c5 = arith.constant 5 : index
    %c0_17 = arith.constant 0 : index
    %11 = vector.load %arg9[%c5, %c0_17] : memref<8x16xf32, #tpu.memory_space<vmem>>, vector<1x16xf32>
    tpu.vector_store %arg9[%c5, %c0_17], %10 {strides = array<i32>} : memref<8x16xf32, #tpu.memory_space<vmem>>, vector<1x16xf32>,
    %c0_18 = arith.constant 0 : index
    %c0_19 = arith.constant 0 : index
    %12 = vector.load %arg9[%c0_18, %c0_19] : memref<8x16xf32, #tpu.memory_space<vmem>>, vector<6x16xf32>
    %c0_20 = arith.constant 0 : index
    %c0_21 = arith.constant 0 : index
    %13 = vector.load %arg7[%c0_20, %c0_21] : memref<120x128xf32, #tpu.memory_space<vmem>>, vector<20x6xf32>
    %c0_22 = arith.constant 0 : index
    %c6 = arith.constant 6 : index
    %14 = vector.load %arg7[%c0_22, %c6] : memref<120x128xf32, #tpu.memory_space<vmem>>, vector<20x1xf32>
    %cst = arith.constant dense<0.000000e+00> : vector<20x16xf32>
    %15 = tpu.matmul %13, %12, %cst {dimension_numbers = #tpu.dot_dimension_numbers<[1], [0], [0], [1], [0, 0, 1, 1], [], []>} : vector<20x6xf32>, vector<6x16xf32>, vector<20x16xf32> -> vector<20x16xf32>
    %16 = vector.broadcast %14 : vector<20x1xf32> to vector<20x16xf32>
    %17 = arith.addf %15, %16 : vector<20x16xf32>
    %18 = math.tanh %17 : vector<20x16xf32>
    %c24 = arith.constant 24 : index
    %c0_23 = arith.constant 0 : index
    %19 = vector.load %arg7[%c24, %c0_23] : memref<120x128xf32, #tpu.memory_space<vmem>>, vector<20x20xf32>
    %c24_24 = arith.constant 24 : index
    %c20 = arith.constant 20 : index
    %20 = vector.load %arg7[%c24_24, %c20] : memref<120x128xf32, #tpu.memory_space<vmem>>, vector<20x1xf32>
    %cst_25 = arith.constant dense<0.000000e+00> : vector<20x16xf32>
    %21 = tpu.matmul %19, %18, %cst_25 {dimension_numbers = #tpu.dot_dimension_numbers<[1], [0], [0], [1], [0, 0, 1, 1], [], []>} : vector<20x20xf32>, vector<20x16xf32>, vector<20x16xf32> -> vector<20x16xf32>
    %22 = vector.broadcast %20 : vector<20x1xf32> to vector<20x16xf32>
    %23 = arith.addf %21, %22 : vector<20x16xf32>
    %24 = math.tanh %23 : vector<20x16xf32>
    %c48 = arith.constant 48 : index
    %c0_26 = arith.constant 0 : index
    %25 = vector.load %arg7[%c48, %c0_26] : memref<120x128xf32, #tpu.memory_space<vmem>>, vector<20x20xf32>
    %c48_27 = arith.constant 48 : index
    %c20_28 = arith.constant 20 : index
    %26 = vector.load %arg7[%c48_27, %c20_28] : memref<120x128xf32, #tpu.memory_space<vmem>>, vector<20x1xf32>
    %cst_29 = arith.constant dense<0.000000e+00> : vector<20x16xf32>
    %27 = tpu.matmul %25, %24, %cst_29 {dimension_numbers = #tpu.dot_dimension_numbers<[1], [0], [0], [1], [0, 0, 1, 1], [], []>} : vector<20x20xf32>, vector<20x16xf32>, vector<20x16xf32> -> vector<20x16xf32>
    %28 = vector.broadcast %26 : vector<20x1xf32> to vector<20x16xf32>
    %29 = arith.addf %27, %28 : vector<20x16xf32>
    %30 = math.tanh %29 : vector<20x16xf32>
    %c72 = arith.constant 72 : index
    %c0_30 = arith.constant 0 : index
    %31 = vector.load %arg7[%c72, %c0_30] : memref<120x128xf32, #tpu.memory_space<vmem>>, vector<20x20xf32>
    %c72_31 = arith.constant 72 : index
    %c20_32 = arith.constant 20 : index
    %32 = vector.load %arg7[%c72_31, %c20_32] : memref<120x128xf32, #tpu.memory_space<vmem>>, vector<20x1xf32>
    %cst_33 = arith.constant dense<0.000000e+00> : vector<20x16xf32>
    %33 = tpu.matmul %31, %30, %cst_33 {dimension_numbers = #tpu.dot_dimension_numbers<[1], [0], [0], [1], [0, 0, 1, 1], [], []>} : vector<20x20xf32>, vector<20x16xf32>, vector<20x16xf32> -> vector<20x16xf32>
    %34 = vector.broadcast %32 : vector<20x1xf32> to vector<20x16xf32>
    %35 = arith.addf %33, %34 : vector<20x16xf32>
    %36 = math.tanh %35 : vector<20x16xf32>
    %c96 = arith.constant 96 : index
    %c0_34 = arith.constant 0 : index
    %37 = vector.load %arg7[%c96, %c0_34] : memref<120x128xf32, #tpu.memory_space<vmem>>, vector<1x20xf32>
    %c96_35 = arith.constant 96 : index
    %c20_36 = arith.constant 20 : index
    %38 = vector.load %arg7[%c96_35, %c20_36] : memref<120x128xf32, #tpu.memory_space<vmem>>, vector<1x1xf32>
    %cst_37 = arith.constant dense<0.000000e+00> : vector<1x16xf32>
    %39 = tpu.matmul %37, %36, %cst_37 {dimension_numbers = #tpu.dot_dimension_numbers<[1], [0], [0], [1], [0, 0, 1, 1], [], []>} : vector<1x20xf32>, vector<20x16xf32>, vector<1x16xf32> -> vector<1x16xf32>
    %40 = vector.broadcast %38 : vector<1x1xf32> to vector<1x16xf32>
    %41 = arith.addf %39, %40 : vector<1x16xf32>
    %c0_38 = arith.constant 0 : index
    %c0_39 = arith.constant 0 : index
    %42 = vector.load %arg8[%c0_38, %c0_39] : memref<1x16xf32, #tpu.memory_space<vmem>>, vector<1x16xf32>
    tpu.vector_store %arg8[%c0_38, %c0_39], %41 {strides = array<i32>} : memref<1x16xf32, #tpu.memory_space<vmem>>, vector<1x16xf32>,
    return
  }
  func.func @transform_0(%arg0: i32) -> (i32, i32) {
    %c0_i32 = arith.constant 0 : i32
    %c0_i32_0 = arith.constant 0 : i32
    return %c0_i32, %arg0 : i32, i32
  }
  func.func @transform_1(%arg0: i32) -> (i32, i32) {
    %c0_i32 = arith.constant 0 : i32
    %c0_i32_0 = arith.constant 0 : i32
    return %c0_i32, %arg0 : i32, i32
  }
  func.func @transform_2(%arg0: i32) -> (i32, i32) {
    %c0_i32 = arith.constant 0 : i32
    %c0_i32_0 = arith.constant 0 : i32
    return %c0_i32, %arg0 : i32, i32
  }
  func.func @transform_3(%arg0: i32) -> (i32, i32) {
    %c0_i32 = arith.constant 0 : i32
    %c0_i32_0 = arith.constant 0 : i32
    return %c0_i32, %arg0 : i32, i32
  }
  func.func @transform_4(%arg0: i32) -> (i32, i32) {
    %c0_i32 = arith.constant 0 : i32
    %c0_i32_0 = arith.constant 0 : i32
    return %c0_i32, %arg0 : i32, i32
  }
  func.func @transform_5(%arg0: i32) -> (i32, i32) {
    %c0_i32 = arith.constant 0 : i32
    %c0_i32_0 = arith.constant 0 : i32
    return %c0_i32, %arg0 : i32, i32
  }
  func.func @transform_6(%arg0: i32) -> (i32, i32) {
    %c0_i32 = arith.constant 0 : i32
    %c0_i32_0 = arith.constant 0 : i32
    %c0_i32_1 = arith.constant 0 : i32
    return %c0_i32, %c0_i32_0 : i32, i32
  }
  func.func @transform_7(%arg0: i32) -> (i32, i32) {
    %c0_i32 = arith.constant 0 : i32
    %c0_i32_0 = arith.constant 0 : i32
    return %c0_i32, %arg0 : i32, i32
  }
}

</mosaic_0001>

<llo_original>
// kernel: tpu_custom_call.1
$region0: #{tpu_custom_call.1}
  #allocation0 [shape = 'u32[]', space=smem, size = 0x4, offset = 0x4, fixed_abs, tag = 'smem constant byte address 0x4 - core index']
  #allocation1 [shape = 'u32[144,128]{1,0:T(1,128)}', space=vmem, size = 0x12000, scoped, tag = 'internal scratch']
  #allocation2 [shape = 'f32[8,16]{1,0:T(8,128)}', space=vmem, size = 0x1000, scoped, tag = 'scratch operand']
  %s0 = inlined_call_operand.hbm [shape: f32[1,16], index: 0, kind: input, shape index: {}]
  %s1 = inlined_call_operand.vmem [shape: f32[1,16], index: 1, kind: input, shape index: {}]
  %s2 = inlined_call_operand.vmem [shape: f32[1,16], index: 2, kind: input, shape index: {}]
  %s3 = inlined_call_operand.vmem [shape: f32[1,16], index: 3, kind: input, shape index: {}]
  %s4 = inlined_call_operand.vmem [shape: f32[1,16], index: 4, kind: input, shape index: {}]
  %s5 = inlined_call_operand.vmem [shape: f32[1,16], index: 5, kind: input, shape index: {}]
  %s6 = inlined_call_operand.hbm [shape: f32[120,128], index: 6, kind: input, shape index: {}]
  %s7 = inlined_call_operand.hbm [shape: f32[1,16], index: 7, kind: output, shape index: {}]
  %s8 = sld [smem:[#allocation0]]
  $region46: #{tpu_custom_call.1} parent=0
    _
  %s10 = ssub.s32 1, %s8
  %s11 = scalar_select 0, %s10, %s8
  $region1: #{tpu_custom_call.1} parent=0
    #allocation3 [shape = 'u8[512]{0}', space=vmem, size = 0x400, scoped, tag = 'input window, operand 0, single buffered']
    #allocation4 [shape = 's32[1]{0}', space=sflag, size = 0x4, scoped, tag = 'scoped memory for tpu_custom_call.1']
    #allocation5 [shape = 's32[1]{0}', space=sflag, size = 0x4, scoped, tag = 'scoped memory for tpu_custom_call.1']
    #allocation6 [shape = 'u8[61440]{0}', space=vmem, size = 0xf000, scoped, tag = 'input window, operand 6, single buffered']
    #allocation7 [shape = 's32[1]{0}', space=sflag, size = 0x4, scoped, tag = 'scoped memory for tpu_custom_call.1']
    #allocation8 [shape = 'u8[512]{0}', space=vmem, size = 0x400, scoped, tag = 'output window, operand 0, single buffered']
    %12 = vsyncpa [#allocation4], 0
    %13 = vsyncpa [#allocation7], 0
    %14 = vsyncpa [#allocation5], 0
    // Predicated region
    $region2: #{tpu_custom_call.1} parent=1 // pred_check
      _
    $region3: #{tpu_custom_call.1} parent=1 // pred_check_branch
      %16 = sbr.rel (0) target = $region5
    $region4: #{tpu_custom_call.1} parent=1 // pred_region
      %s18 = ssub.s32 16, 16
      %19 = vsyncadd [#allocation4], %s18
      %s21 = sshll.u32 [#allocation3], 4
      %s22 = int_to_ptr.vmem [resolvable:$true] %s21
      %24 = dma.hbm_to_vmem [thread:$0]  %s0, 16, %s22, [#allocation4]
    $region5: #{tpu_custom_call.1} parent=1 // pred_fallthru
      _
    // Predicated region
    $region6: #{tpu_custom_call.1} parent=1 // pred_check
      _
    $region7: #{tpu_custom_call.1} parent=1 // pred_check_branch
      %26 = sbr.rel (0) target = $region9
    $region8: #{tpu_custom_call.1} parent=1 // pred_region
      _
    $region9: #{tpu_custom_call.1} parent=1 // pred_fallthru
      _
    // Predicated region
    $region10: #{tpu_custom_call.1} parent=1 // pred_check
      _
    $region11: #{tpu_custom_call.1} parent=1 // pred_check_branch
      %28 = sbr.rel (0) target = $region13
    $region12: #{tpu_custom_call.1} parent=1 // pred_region
      _
    $region13: #{tpu_custom_call.1} parent=1 // pred_fallthru
      _
    // Predicated region
    $region14: #{tpu_custom_call.1} parent=1 // pred_check
      _
    $region15: #{tpu_custom_call.1} parent=1 // pred_check_branch
      %30 = sbr.rel (0) target = $region17
    $region16: #{tpu_custom_call.1} parent=1 // pred_region
      _
    $region17: #{tpu_custom_call.1} parent=1 // pred_fallthru
      _
    // Predicated region
    $region18: #{tpu_custom_call.1} parent=1 // pred_check
      _
    $region19: #{tpu_custom_call.1} parent=1 // pred_check_branch
      %32 = sbr.rel (0) target = $region21
    $region20: #{tpu_custom_call.1} parent=1 // pred_region
      _
    $region21: #{tpu_custom_call.1} parent=1 // pred_fallthru
      _
    // Predicated region
    $region22: #{tpu_custom_call.1} parent=1 // pred_check
      _
    $region23: #{tpu_custom_call.1} parent=1 // pred_check_branch
      %34 = sbr.rel (0) target = $region25
    $region24: #{tpu_custom_call.1} parent=1 // pred_region
      _
    $region25: #{tpu_custom_call.1} parent=1 // pred_fallthru
      _
    // Predicated region
    $region26: #{tpu_custom_call.1} parent=1 // pred_check
      _
    $region27: #{tpu_custom_call.1} parent=1 // pred_check_branch
      %36 = sbr.rel (0) target = $region29
    $region28: #{tpu_custom_call.1} parent=1 // pred_region
      %s38 = ssub.s32 1920, 1920
      %39 = vsyncadd [#allocation7], %s38
      %s40 = sshll.u32 [#allocation6], 4
      %s41 = int_to_ptr.vmem [resolvable:$true] %s40
      %46 = dma.hbm_to_vmem [thread:$0]  %s6, 1920, %s41, [#allocation7], 128, 128, 8
    $region29: #{tpu_custom_call.1} parent=1 // pred_fallthru
      _
    // Predicated region
    $region30: #{tpu_custom_call.1} parent=1 // pred_check
      _
    $region31: #{tpu_custom_call.1} parent=1 // pred_check_branch
      %48 = sbr.rel (0) target = $region33
    $region32: #{tpu_custom_call.1} parent=1 // pred_region
      %49 = dma.done [#allocation4], 16
    $region33: #{tpu_custom_call.1} parent=1 // pred_fallthru
      _
    // Predicated region
    $region34: #{tpu_custom_call.1} parent=1 // pred_check
      _
    $region35: #{tpu_custom_call.1} parent=1 // pred_check_branch
      %51 = sbr.rel (0) target = $region37
    $region36: #{tpu_custom_call.1} parent=1 // pred_region
      %52 = dma.done [#allocation7], 1920
    $region37: #{tpu_custom_call.1} parent=1 // pred_fallthru
      _
    %v53 = vld [vmem:[#allocation3] sm:$0x1]
    %vm54 = vcmask 122880
    %55 = vst.msk [vmem:[#allocation2] sm:$0x1] %vm54, %v53
    %v56 = vld [vmem:[%s1] sm:$0x1]
    %57 = vst.msk [vmem:[#allocation2 + $0x1] sm:$0x1] %vm54, %v56
    %v58 = vld [vmem:[%s2] sm:$0x1]
    %59 = vst.msk [vmem:[#allocation2 + $0x2] sm:$0x1] %vm54, %v58
    %v60 = vld [vmem:[%s3] sm:$0x1]
    %61 = vst.msk [vmem:[#allocation2 + $0x3] sm:$0x1] %vm54, %v60
    %v62 = vld [vmem:[%s4] sm:$0x1]
    %63 = vst.msk [vmem:[#allocation2 + $0x4] sm:$0x1] %vm54, %v62
    %v64 = vld [vmem:[%s5] sm:$0x1]
    %65 = vst.msk [vmem:[#allocation2 + $0x5] sm:$0x1] %vm54, %v64
    %v66 = vld [vmem:[#allocation2] sm:$0x3f]
    %v67 = vld [vmem:[#allocation6] sm:$0xff]
    %v68 = vld [vmem:[#allocation6 + $0x8] sm:$0xff]
    %v69 = vld [vmem:[#allocation6 + $0x10] sm:$0xf]
    %71 = vset.pattern.permute.xlu0 6
    %72 = vperm.xlu0 %71, %v67
    %v73 = vpop.permute.xlu0 %72
    %76 = vset.pattern.permute.xlu0 6
    %77 = vperm.xlu0 %76, %v68
    %v78 = vpop.permute.xlu0 %77
    %81 = vset.pattern.permute.xlu0 6
    %82 = vperm.xlu0 %81, %v69
    %v83 = vpop.permute.xlu0 %82
    %vm85 = vcmask 48128
    %v86 = vsel %vm85, %v67, 0
    %v88 = vsel %vm85, %v68, 0
    %v90 = vsel %vm85, %v69, 0
    %vm92 = vcmask 1045504
    %v94 = vsel %vm92, %v66, 0
    %96 = vmatprep.subr.mxu0 0.0
    %97 = vmatpush1.msra.mxu0 %v94
    %98 = vmatprep.subr.mxu0 0.0
    %99 = vmatpush1.msra.mxu0 0.0
    %100 = vmatprep.subr.mxu0 0.0
    %101 = vmatpush1.msra.mxu0 0.0
    %102 = vmatprep.subr.mxu0 0.0
    %103 = vmatpush1.msra.mxu0 0.0
    %104 = vmatprep.subr.mxu0 0.0
    %105 = vmatpush1.msra.mxu0 0.0
    %106 = vmatprep.subr.mxu0 0.0
    %107 = vmatpush1.msra.mxu0 0.0
    %108 = vmatprep.subr.mxu0 0.0
    %109 = vmatpush1.msra.mxu0 0.0
    %110 = vmatprep.subr.mxu0 0.0
    %111 = vmatpush1.msra.mxu0 0.0
    %112 = vmatprep.subr.mxu0 0.0
    %113 = vmatpush1.msra.mxu0 0.0
    %114 = vmatprep.subr.mxu0 0.0
    %115 = vmatpush1.msra.mxu0 0.0
    %116 = vmatprep.subr.mxu0 0.0
    %117 = vmatpush1.msra.mxu0 0.0
    %118 = vmatprep.subr.mxu0 0.0
    %119 = vmatpush1.msra.mxu0 0.0
    %120 = vmatprep.subr.mxu0 0.0
    %121 = vmatpush1.msra.mxu0 0.0
    %122 = vmatprep.subr.mxu0 0.0
    %123 = vmatpush1.msra.mxu0 0.0
    %124 = vmatprep.subr.mxu0 0.0
    %125 = vmatpush1.msra.mxu0 0.0
    %126 = vmatprep.subr.mxu0 0.0
    %127 = vmatpush1.msra.mxu0 0.0
    %128 = vmatprep.subr.mxu0 0.0
    %129 = vmatpush1.msra.mxu0 0.0
    %130 = vmatprep.subr.mxu0 0.0
    %131 = vmatpush1.msra.mxu0 0.0
    %132 = vmatprep.subr.mxu0 0.0
    %133 = vmatpush1.msra.mxu0 0.0
    %134 = vmatprep.subr.mxu0 0.0
    %135 = vmatpush1.msra.mxu0 0.0
    %136 = vmatprep.subr.mxu0 0.0
    %137 = vmatpush1.msra.mxu0 0.0
    %138 = vmatprep.subr.mxu0 0.0
    %139 = vmatpush1.msra.mxu0 0.0
    %140 = vmatprep.subr.mxu0 0.0
    %141 = vmatpush1.msra.mxu0 0.0
    %142 = vmatprep.subr.mxu0 0.0
    %143 = vmatpush1.msra.mxu0 0.0
    %144 = vmatprep.subr.mxu0 0.0
    %145 = vmatpush1.msra.mxu0 0.0
    %146 = vmatprep.subr.mxu0 0.0
    %147 = vmatpush1.msra.mxu0 0.0
    %148 = vmatprep.subr.mxu0 0.0
    %149 = vmatpush1.msra.mxu0 0.0
    %150 = vmatprep.subr.mxu0 0.0
    %151 = vmatpush1.msra.mxu0 0.0
    %152 = vmatprep.subr.mxu0 0.0
    %153 = vmatpush1.msra.mxu0 0.0
    %154 = vmatprep.subr.mxu0 0.0
    %155 = vmatpush1.msra.mxu0 0.0
    %156 = vmatprep.subr.mxu0 0.0
    %157 = vmatpush1.msra.mxu0 0.0
    %158 = vmatprep.subr.mxu0 0.0
    %159 = vmatpush1.msra.mxu0 0.0
    %160 = vmatprep.mubr.f32.mxu0 0.0
    %161 = vmatmul.mubr.f32.gmra.mrb[0].mxu0 %v86
    %v162 = vpop.f32.mrb[0].mxu0
    %v163 = vadd.f32 %v73, %v162
    %v164 = vpop.f32.mrb[0].mxu0
    %165 = vmatprep.mubr.f32.mxu0 0.0
    %166 = vmatmul.mubr.f32.gmra.mrb[0].mxu0 %v88
    %v167 = vpop.f32.mrb[0].mxu0
    %v168 = vadd.f32 %v78, %v167
    %v169 = vpop.f32.mrb[0].mxu0
    %170 = vmatprep.mubr.f32.mxu0 0.0
    %171 = vmatmul.mubr.f32.gmra.mrb[0].mxu0 %v90
    %v172 = vpop.f32.mrb[0].mxu0
    %v173 = vadd.f32 %v83, %v172
    %v174 = vpop.f32.mrb[0].mxu0
    %175 = vdwg.mxu0
    %v176 = vtanh.pop %v163
    %v177 = vtanh.pop %v168
    %v178 = vtanh.pop %v173
    %v179 = vld [vmem:[#allocation6 + $0x18] sm:$0xff]
    %v180 = vld [vmem:[#allocation6 + $0x20] sm:$0xff]
    %v181 = vld [vmem:[#allocation6 + $0x28] sm:$0xf]
    %183 = vset.pattern.permute.xlu0 20
    %184 = vperm.xlu0 %183, %v179
    %v185 = vpop.permute.xlu0 %184
    %188 = vset.pattern.permute.xlu0 20
    %189 = vperm.xlu0 %188, %v180
    %v190 = vpop.permute.xlu0 %189
    %193 = vset.pattern.permute.xlu0 20
    %194 = vperm.xlu0 %193, %v181
    %v195 = vpop.permute.xlu0 %194
    %vm197 = vcmask 162816
    %v198 = vsel %vm197, %v179, 0
    %v200 = vsel %vm197, %v180, 0
    %v202 = vsel %vm197, %v181, 0
    %vm204 = vcmask 1043456
    %v206 = vsel %vm204, %v178, 0
    %208 = vmatprep.subr.mxu0 0.0
    %209 = vmatpush1.msra.mxu0 %v176
    %210 = vmatprep.subr.mxu0 0.0
    %211 = vmatpush1.msra.mxu0 %v177
    %212 = vmatprep.subr.mxu0 0.0
    %213 = vmatpush1.msra.mxu0 %v206
    %214 = vmatprep.subr.mxu0 0.0
    %215 = vmatpush1.msra.mxu0 0.0
    %216 = vmatprep.subr.mxu0 0.0
    %217 = vmatpush1.msra.mxu0 0.0
    %218 = vmatprep.subr.mxu0 0.0
    %219 = vmatpush1.msra.mxu0 0.0
    %220 = vmatprep.subr.mxu0 0.0
    %221 = vmatpush1.msra.mxu0 0.0
    %222 = vmatprep.subr.mxu0 0.0
    %223 = vmatpush1.msra.mxu0 0.0
    %224 = vmatprep.subr.mxu0 0.0
    %225 = vmatpush1.msra.mxu0 0.0
    %226 = vmatprep.subr.mxu0 0.0
    %227 = vmatpush1.msra.mxu0 0.0
    %228 = vmatprep.subr.mxu0 0.0
    %229 = vmatpush1.msra.mxu0 0.0
    %230 = vmatprep.subr.mxu0 0.0
    %231 = vmatpush1.msra.mxu0 0.0
    %232 = vmatprep.subr.mxu0 0.0
    %233 = vmatpush1.msra.mxu0 0.0
    %234 = vmatprep.subr.mxu0 0.0
    %235 = vmatpush1.msra.mxu0 0.0
    %236 = vmatprep.subr.mxu0 0.0
    %237 = vmatpush1.msra.mxu0 0.0
    %238 = vmatprep.subr.mxu0 0.0
    %239 = vmatpush1.msra.mxu0 0.0
    %240 = vmatprep.subr.mxu0 0.0
    %241 = vmatpush1.msra.mxu0 0.0
    %242 = vmatprep.subr.mxu0 0.0
    %243 = vmatpush1.msra.mxu0 0.0
    %244 = vmatprep.subr.mxu0 0.0
    %245 = vmatpush1.msra.mxu0 0.0
    %246 = vmatprep.subr.mxu0 0.0
    %247 = vmatpush1.msra.mxu0 0.0
    %248 = vmatprep.subr.mxu0 0.0
    %249 = vmatpush1.msra.mxu0 0.0
    %250 = vmatprep.subr.mxu0 0.0
    %251 = vmatpush1.msra.mxu0 0.0
    %252 = vmatprep.subr.mxu0 0.0
    %253 = vmatpush1.msra.mxu0 0.0
    %254 = vmatprep.subr.mxu0 0.0
    %255 = vmatpush1.msra.mxu0 0.0
    %256 = vmatprep.subr.mxu0 0.0
    %257 = vmatpush1.msra.mxu0 0.0
    %258 = vmatprep.subr.mxu0 0.0
    %259 = vmatpush1.msra.mxu0 0.0
    %260 = vmatprep.subr.mxu0 0.0
    %261 = vmatpush1.msra.mxu0 0.0
    %262 = vmatprep.subr.mxu0 0.0
    %263 = vmatpush1.msra.mxu0 0.0
    %264 = vmatprep.subr.mxu0 0.0
    %265 = vmatpush1.msra.mxu0 0.0
    %266 = vmatprep.subr.mxu0 0.0
    %267 = vmatpush1.msra.mxu0 0.0
    %268 = vmatprep.subr.mxu0 0.0
    %269 = vmatpush1.msra.mxu0 0.0
    %270 = vmatprep.subr.mxu0 0.0
    %271 = vmatpush1.msra.mxu0 0.0
    %272 = vmatprep.mubr.f32.mxu0 0.0
    %273 = vmatmul.mubr.f32.gmra.mrb[0].mxu0 %v198
    %v274 = vpop.f32.mrb[0].mxu0
    %v275 = vadd.f32 %v185, %v274
    %v276 = vpop.f32.mrb[0].mxu0
    %277 = vmatprep.mubr.f32.mxu0 0.0
    %278 = vmatmul.mubr.f32.gmra.mrb[0].mxu0 %v200
    %v279 = vpop.f32.mrb[0].mxu0
    %v280 = vadd.f32 %v190, %v279
    %v281 = vpop.f32.mrb[0].mxu0
    %282 = vmatprep.mubr.f32.mxu0 0.0
    %283 = vmatmul.mubr.f32.gmra.mrb[0].mxu0 %v202
    %v284 = vpop.f32.mrb[0].mxu0
    %v285 = vadd.f32 %v195, %v284
    %v286 = vpop.f32.mrb[0].mxu0
    %287 = vdwg.mxu0
    %v288 = vtanh.pop %v275
    %v289 = vtanh.pop %v280
    %v290 = vtanh.pop %v285
    %v291 = vld [vmem:[#allocation6 + $0x30] sm:$0xff]
    %v292 = vld [vmem:[#allocation6 + $0x38] sm:$0xff]
    %v293 = vld [vmem:[#allocation6 + $0x40] sm:$0xf]
    %295 = vset.pattern.permute.xlu0 20
    %296 = vperm.xlu0 %295, %v291
    %v297 = vpop.permute.xlu0 %296
    %300 = vset.pattern.permute.xlu0 20
    %301 = vperm.xlu0 %300, %v292
    %v302 = vpop.permute.xlu0 %301
    %305 = vset.pattern.permute.xlu0 20
    %306 = vperm.xlu0 %305, %v293
    %v307 = vpop.permute.xlu0 %306
    %v309 = vsel %vm197, %v291, 0
    %v311 = vsel %vm197, %v292, 0
    %v313 = vsel %vm197, %v293, 0
    %v316 = vsel %vm204, %v290, 0
    %318 = vmatprep.subr.mxu0 0.0
    %319 = vmatpush1.msra.mxu0 %v288
    %320 = vmatprep.subr.mxu0 0.0
    %321 = vmatpush1.msra.mxu0 %v289
    %322 = vmatprep.subr.mxu0 0.0
    %323 = vmatpush1.msra.mxu0 %v316
    %324 = vmatprep.subr.mxu0 0.0
    %325 = vmatpush1.msra.mxu0 0.0
    %326 = vmatprep.subr.mxu0 0.0
    %327 = vmatpush1.msra.mxu0 0.0
    %328 = vmatprep.subr.mxu0 0.0
    %329 = vmatpush1.msra.mxu0 0.0
    %330 = vmatprep.subr.mxu0 0.0
    %331 = vmatpush1.msra.mxu0 0.0
    %332 = vmatprep.subr.mxu0 0.0
    %333 = vmatpush1.msra.mxu0 0.0
    %334 = vmatprep.subr.mxu0 0.0
    %335 = vmatpush1.msra.mxu0 0.0
    %336 = vmatprep.subr.mxu0 0.0
    %337 = vmatpush1.msra.mxu0 0.0
    %338 = vmatprep.subr.mxu0 0.0
    %339 = vmatpush1.msra.mxu0 0.0
    %340 = vmatprep.subr.mxu0 0.0
    %341 = vmatpush1.msra.mxu0 0.0
    %342 = vmatprep.subr.mxu0 0.0
    %343 = vmatpush1.msra.mxu0 0.0
    %344 = vmatprep.subr.mxu0 0.0
    %345 = vmatpush1.msra.mxu0 0.0
    %346 = vmatprep.subr.mxu0 0.0
    %347 = vmatpush1.msra.mxu0 0.0
    %348 = vmatprep.subr.mxu0 0.0
    %349 = vmatpush1.msra.mxu0 0.0
    %350 = vmatprep.subr.mxu0 0.0
    %351 = vmatpush1.msra.mxu0 0.0
    %352 = vmatprep.subr.mxu0 0.0
    %353 = vmatpush1.msra.mxu0 0.0
    %354 = vmatprep.subr.mxu0 0.0
    %355 = vmatpush1.msra.mxu0 0.0
    %356 = vmatprep.subr.mxu0 0.0
    %357 = vmatpush1.msra.mxu0 0.0
    %358 = vmatprep.subr.mxu0 0.0
    %359 = vmatpush1.msra.mxu0 0.0
    %360 = vmatprep.subr.mxu0 0.0
    %361 = vmatpush1.msra.mxu0 0.0
    %362 = vmatprep.subr.mxu0 0.0
    %363 = vmatpush1.msra.mxu0 0.0
    %364 = vmatprep.subr.mxu0 0.0
    %365 = vmatpush1.msra.mxu0 0.0
    %366 = vmatprep.subr.mxu0 0.0
    %367 = vmatpush1.msra.mxu0 0.0
    %368 = vmatprep.subr.mxu0 0.0
    %369 = vmatpush1.msra.mxu0 0.0
    %370 = vmatprep.subr.mxu0 0.0
    %371 = vmatpush1.msra.mxu0 0.0
    %372 = vmatprep.subr.mxu0 0.0
    %373 = vmatpush1.msra.mxu0 0.0
    %374 = vmatprep.subr.mxu0 0.0
    %375 = vmatpush1.msra.mxu0 0.0
    %376 = vmatprep.subr.mxu0 0.0
    %377 = vmatpush1.msra.mxu0 0.0
    %378 = vmatprep.subr.mxu0 0.0
    %379 = vmatpush1.msra.mxu0 0.0
    %380 = vmatprep.subr.mxu0 0.0
    %381 = vmatpush1.msra.mxu0 0.0
    %382 = vmatprep.mubr.f32.mxu0 0.0
    %383 = vmatmul.mubr.f32.gmra.mrb[0].mxu0 %v309
    %v384 = vpop.f32.mrb[0].mxu0
    %v385 = vadd.f32 %v297, %v384
    %v386 = vpop.f32.mrb[0].mxu0
    %387 = vmatprep.mubr.f32.mxu0 0.0
    %388 = vmatmul.mubr.f32.gmra.mrb[0].mxu0 %v311
    %v389 = vpop.f32.mrb[0].mxu0
    %v390 = vadd.f32 %v302, %v389
    %v391 = vpop.f32.mrb[0].mxu0
    %392 = vmatprep.mubr.f32.mxu0 0.0
    %393 = vmatmul.mubr.f32.gmra.mrb[0].mxu0 %v313
    %v394 = vpop.f32.mrb[0].mxu0
    %v395 = vadd.f32 %v307, %v394
    %v396 = vpop.f32.mrb[0].mxu0
    %397 = vdwg.mxu0
    %v398 = vtanh.pop %v385
    %v399 = vtanh.pop %v390
    %v400 = vtanh.pop %v395
    %v401 = vld [vmem:[#allocation6 + $0x48] sm:$0xff]
    %v402 = vld [vmem:[#allocation6 + $0x50] sm:$0xff]
    %v403 = vld [vmem:[#allocation6 + $0x58] sm:$0xf]
    %405 = vset.pattern.permute.xlu0 20
    %406 = vperm.xlu0 %405, %v401
    %v407 = vpop.permute.xlu0 %406
    %410 = vset.pattern.permute.xlu0 20
    %411 = vperm.xlu0 %410, %v402
    %v412 = vpop.permute.xlu0 %411
    %415 = vset.pattern.permute.xlu0 20
    %416 = vperm.xlu0 %415, %v403
    %v417 = vpop.permute.xlu0 %416
    %v419 = vsel %vm197, %v401, 0
    %v421 = vsel %vm197, %v402, 0
    %v423 = vsel %vm197, %v403, 0
    %v426 = vsel %vm204, %v400, 0
    %428 = vmatprep.subr.mxu0 0.0
    %429 = vmatpush1.msra.mxu0 %v398
    %430 = vmatprep.subr.mxu0 0.0
    %431 = vmatpush1.msra.mxu0 %v399
    %432 = vmatprep.subr.mxu0 0.0
    %433 = vmatpush1.msra.mxu0 %v426
    %434 = vmatprep.subr.mxu0 0.0
    %435 = vmatpush1.msra.mxu0 0.0
    %436 = vmatprep.subr.mxu0 0.0
    %437 = vmatpush1.msra.mxu0 0.0
    %438 = vmatprep.subr.mxu0 0.0
    %439 = vmatpush1.msra.mxu0 0.0
    %440 = vmatprep.subr.mxu0 0.0
    %441 = vmatpush1.msra.mxu0 0.0
    %442 = vmatprep.subr.mxu0 0.0
    %443 = vmatpush1.msra.mxu0 0.0
    %444 = vmatprep.subr.mxu0 0.0
    %445 = vmatpush1.msra.mxu0 0.0
    %446 = vmatprep.subr.mxu0 0.0
    %447 = vmatpush1.msra.mxu0 0.0
    %448 = vmatprep.subr.mxu0 0.0
    %449 = vmatpush1.msra.mxu0 0.0
    %450 = vmatprep.subr.mxu0 0.0
    %451 = vmatpush1.msra.mxu0 0.0
    %452 = vmatprep.subr.mxu0 0.0
    %453 = vmatpush1.msra.mxu0 0.0
    %454 = vmatprep.subr.mxu0 0.0
    %455 = vmatpush1.msra.mxu0 0.0
    %456 = vmatprep.subr.mxu0 0.0
    %457 = vmatpush1.msra.mxu0 0.0
    %458 = vmatprep.subr.mxu0 0.0
    %459 = vmatpush1.msra.mxu0 0.0
    %460 = vmatprep.subr.mxu0 0.0
    %461 = vmatpush1.msra.mxu0 0.0
    %462 = vmatprep.subr.mxu0 0.0
    %463 = vmatpush1.msra.mxu0 0.0
    %464 = vmatprep.subr.mxu0 0.0
    %465 = vmatpush1.msra.mxu0 0.0
    %466 = vmatprep.subr.mxu0 0.0
    %467 = vmatpush1.msra.mxu0 0.0
    %468 = vmatprep.subr.mxu0 0.0
    %469 = vmatpush1.msra.mxu0 0.0
    %470 = vmatprep.subr.mxu0 0.0
    %471 = vmatpush1.msra.mxu0 0.0
    %472 = vmatprep.subr.mxu0 0.0
    %473 = vmatpush1.msra.mxu0 0.0
    %474 = vmatprep.subr.mxu0 0.0
    %475 = vmatpush1.msra.mxu0 0.0
    %476 = vmatprep.subr.mxu0 0.0
    %477 = vmatpush1.msra.mxu0 0.0
    %478 = vmatprep.subr.mxu0 0.0
    %479 = vmatpush1.msra.mxu0 0.0
    %480 = vmatprep.subr.mxu0 0.0
    %481 = vmatpush1.msra.mxu0 0.0
    %482 = vmatprep.subr.mxu0 0.0
    %483 = vmatpush1.msra.mxu0 0.0
    %484 = vmatprep.subr.mxu0 0.0
    %485 = vmatpush1.msra.mxu0 0.0
    %486 = vmatprep.subr.mxu0 0.0
    %487 = vmatpush1.msra.mxu0 0.0
    %488 = vmatprep.subr.mxu0 0.0
    %489 = vmatpush1.msra.mxu0 0.0
    %490 = vmatprep.subr.mxu0 0.0
    %491 = vmatpush1.msra.mxu0 0.0
    %492 = vmatprep.mubr.f32.mxu0 0.0
    %493 = vmatmul.mubr.f32.gmra.mrb[0].mxu0 %v419
    %v494 = vpop.f32.mrb[0].mxu0
    %v495 = vadd.f32 %v407, %v494
    %v496 = vpop.f32.mrb[0].mxu0
    %497 = vmatprep.mubr.f32.mxu0 0.0
    %498 = vmatmul.mubr.f32.gmra.mrb[0].mxu0 %v421
    %v499 = vpop.f32.mrb[0].mxu0
    %v500 = vadd.f32 %v412, %v499
    %v501 = vpop.f32.mrb[0].mxu0
    %502 = vmatprep.mubr.f32.mxu0 0.0
    %503 = vmatmul.mubr.f32.gmra.mrb[0].mxu0 %v423
    %v504 = vpop.f32.mrb[0].mxu0
    %v505 = vadd.f32 %v417, %v504
    %v506 = vpop.f32.mrb[0].mxu0
    %507 = vdwg.mxu0
    %v508 = vtanh.pop %v495
    %v509 = vtanh.pop %v500
    %v510 = vtanh.pop %v505
    %v511 = vld [vmem:[#allocation6 + $0x60] sm:$0x1]
    %513 = vset.pattern.permute.xlu0 20
    %514 = vperm.xlu0 %513, %v511
    %v515 = vpop.permute.xlu0 %514
    %v517 = vsel %vm197, %v511, 0
    %v520 = vsel %vm204, %v510, 0
    %522 = vmatprep.subr.mxu0 0.0
    %523 = vmatpush1.msra.mxu0 %v508
    %524 = vmatprep.subr.mxu0 0.0
    %525 = vmatpush1.msra.mxu0 %v509
    %526 = vmatprep.subr.mxu0 0.0
    %527 = vmatpush1.msra.mxu0 %v520
    %528 = vmatprep.subr.mxu0 0.0
    %529 = vmatpush1.msra.mxu0 0.0
    %530 = vmatprep.subr.mxu0 0.0
    %531 = vmatpush1.msra.mxu0 0.0
    %532 = vmatprep.subr.mxu0 0.0
    %533 = vmatpush1.msra.mxu0 0.0
    %534 = vmatprep.subr.mxu0 0.0
    %535 = vmatpush1.msra.mxu0 0.0
    %536 = vmatprep.subr.mxu0 0.0
    %537 = vmatpush1.msra.mxu0 0.0
    %538 = vmatprep.subr.mxu0 0.0
    %539 = vmatpush1.msra.mxu0 0.0
    %540 = vmatprep.subr.mxu0 0.0
    %541 = vmatpush1.msra.mxu0 0.0
    %542 = vmatprep.subr.mxu0 0.0
    %543 = vmatpush1.msra.mxu0 0.0
    %544 = vmatprep.subr.mxu0 0.0
    %545 = vmatpush1.msra.mxu0 0.0
    %546 = vmatprep.subr.mxu0 0.0
    %547 = vmatpush1.msra.mxu0 0.0
    %548 = vmatprep.subr.mxu0 0.0
    %549 = vmatpush1.msra.mxu0 0.0
    %550 = vmatprep.subr.mxu0 0.0
    %551 = vmatpush1.msra.mxu0 0.0
    %552 = vmatprep.subr.mxu0 0.0
    %553 = vmatpush1.msra.mxu0 0.0
    %554 = vmatprep.subr.mxu0 0.0
    %555 = vmatpush1.msra.mxu0 0.0
    %556 = vmatprep.subr.mxu0 0.0
    %557 = vmatpush1.msra.mxu0 0.0
    %558 = vmatprep.subr.mxu0 0.0
    %559 = vmatpush1.msra.mxu0 0.0
    %560 = vmatprep.subr.mxu0 0.0
    %561 = vmatpush1.msra.mxu0 0.0
    %562 = vmatprep.subr.mxu0 0.0
    %563 = vmatpush1.msra.mxu0 0.0
    %564 = vmatprep.subr.mxu0 0.0
    %565 = vmatpush1.msra.mxu0 0.0
    %566 = vmatprep.subr.mxu0 0.0
    %567 = vmatpush1.msra.mxu0 0.0
    %568 = vmatprep.subr.mxu0 0.0
    %569 = vmatpush1.msra.mxu0 0.0
    %570 = vmatprep.subr.mxu0 0.0
    %571 = vmatpush1.msra.mxu0 0.0
    %572 = vmatprep.subr.mxu0 0.0
    %573 = vmatpush1.msra.mxu0 0.0
    %574 = vmatprep.subr.mxu0 0.0
    %575 = vmatpush1.msra.mxu0 0.0
    %576 = vmatprep.subr.mxu0 0.0
    %577 = vmatpush1.msra.mxu0 0.0
    %578 = vmatprep.subr.mxu0 0.0
    %579 = vmatpush1.msra.mxu0 0.0
    %580 = vmatprep.subr.mxu0 0.0
    %581 = vmatpush1.msra.mxu0 0.0
    %582 = vmatprep.subr.mxu0 0.0
    %583 = vmatpush1.msra.mxu0 0.0
    %584 = vmatprep.subr.mxu0 0.0
    %585 = vmatpush1.msra.mxu0 0.0
    %586 = vmatprep.mubr.f32.mxu0 0.0
    %587 = vmatmul.mubr.f32.gmra.mrb[0].mxu0 %v517
    %v588 = vpop.f32.mrb[0].mxu0
    %v589 = vadd.f32 %v515, %v588
    %v590 = vpop.f32.mrb[0].mxu0
    %591 = vdwg.mxu0
    %592 = vst.msk [vmem:[#allocation8] sm:$0x1] %vm54, %v589
    // Predicated region
    $region38: #{tpu_custom_call.1} parent=1 // pred_check
      _
    $region39: #{tpu_custom_call.1} parent=1 // pred_check_branch
      %594 = sbr.rel (0) target = $region41
    $region40: #{tpu_custom_call.1} parent=1 // pred_region
      %s596 = ssub.s32 16, 16
      %597 = vsyncadd [#allocation5], %s596
      %s599 = sshll.u32 [#allocation8], 4
      %s600 = int_to_ptr.vmem [resolvable:$true] %s599
      %602 = dma.vmem_to_hbm [thread:$0]  %s600, 16, %s7, [#allocation5]
    $region41: #{tpu_custom_call.1} parent=1 // pred_fallthru
      _
    // Predicated region
    $region42: #{tpu_custom_call.1} parent=1 // pred_check
      _
    $region43: #{tpu_custom_call.1} parent=1 // pred_check_branch
      %604 = sbr.rel (0) target = $region45
    $region44: #{tpu_custom_call.1} parent=1 // pred_region
      %605 = dma.done [#allocation5], 16
    $region45: #{tpu_custom_call.1} parent=1 // pred_fallthru
      _
    %606 = vsyncpa [#allocation4], 1
    %607 = vsyncpa [#allocation7], 1
    %608 = vsyncpa [#allocation5], 1

</llo_original>
